<compile_context>
chip_gen: v7x
topology: tpu7x:2x2x1
jax: 0.10.0
libtpu: 0.0.40
codegen_flags: <defaults>
</compile_context>

<pallas_src>
import functools

import jax
import jax.numpy as jnp
import numpy as np
from jax import lax
from jax.experimental import pallas as pl
from jax.experimental.pallas import tpu as pltpu


def _round_up(x, m):
    return ((x + m - 1) // m) * m


def _pad2d(x, rows, cols, dtype=jnp.float32):
    """Zero-pad a 2-D array to (rows, cols); no-op copy avoided when aligned."""
    x = x.astype(dtype)
    r, c = x.shape
    if r == rows and c == cols:
        return x
    return jnp.zeros((rows, cols), dtype).at[:r, :c].set(x)


# --------------------------- fused scoring kernels ---------------------------

def _embed_image_block(img_ref, w_ref, b_ref, feat_ref, compute_dtype):
    # feat = img @ W_img + b  (MXU matmul, f32 accumulation; bias/scratch f32)
    feat_ref[...] = (
        jnp.dot(img_ref[...].astype(compute_dtype),
                w_ref[...].astype(compute_dtype),
                preferred_element_type=jnp.float32)
        + b_ref[...]
    )


def _distance_score_kernel(img_ref, w_ref, b_ref, pair_ref, pnorm_ref,
                           o_ref, feat_ref, fnorm_ref, *, compute_dtype):
    # score = -(||f||^2 - 2 f.p + ||p||^2) = 2*(f @ p^T) - ||f||^2 - ||p||^2
    @pl.when(pl.program_id(1) == 0)
    def _():
        # image embedding computed once per B-tile, reused for every pair tile
        _embed_image_block(img_ref, w_ref, b_ref, feat_ref, compute_dtype)
        f = feat_ref[...]
        fnorm_ref[...] = jnp.sum(f * f, axis=-1, keepdims=True)      # (TB, 1) f32

    cross = lax.dot_general(                      # (TB, TP) on the MXU, no .T
        feat_ref[...].astype(compute_dtype),
        pair_ref[...].astype(compute_dtype),
        dimension_numbers=(((1,), (1,)), ((), ())),
        preferred_element_type=jnp.float32)
    o_ref[...] = 2.0 * cross - fnorm_ref[...] - pnorm_ref[...]


def _direct_score_kernel(img_ref, w_ref, b_ref, pair_ref,
                         o_ref, feat_ref, *, compute_dtype):
    @pl.when(pl.program_id(1) == 0)
    def _():
        _embed_image_block(img_ref, w_ref, b_ref, feat_ref, compute_dtype)

    o_ref[...] = lax.dot_general(
        feat_ref[...].astype(compute_dtype),
        pair_ref[...].astype(compute_dtype),
        dimension_numbers=(((1,), (1,)), ((), ())),
        preferred_element_type=jnp.float32)


def fused_scores(img, w_img, b_img, pair_embeds, *, mode="distance",
                 compute_dtype=jnp.float32, tb=256, tp=512):
    """Fused image_embedder + pair scoring.

    img: (B, F) raw features, w_img: (F, D), b_img: (D,), pair_embeds: (P, D)
    -> (B, P) f32 scores.
    """
    B, F = img.shape
    P, D = pair_embeds.shape
    assert w_img.shape == (F, D)

    # Lane/sublane alignment: last dims -> multiples of 128, B -> multiple of 8.
    B_pad = _round_up(B, 8)
    F_pad = _round_up(F, 128)
    D_pad = _round_up(D, 128)
    P_pad = _round_up(P, 128)

    TB = min(tb, B_pad)
    TP = min(tp, P_pad)
    B_pad = _round_up(B_pad, TB)
    P_pad = _round_up(P_pad, TP)

    img_p = _pad2d(img, B_pad, F_pad)
    w_p = _pad2d(w_img, F_pad, D_pad)
    b_p = _pad2d(b_img.reshape(1, D), 1, D_pad)
    pair_p = _pad2d(pair_embeds, P_pad, D_pad)
    # ||pair||^2 precomputed once (f32), consumed as a lane-dense (1, TP) tile.
    # Padded pair rows are zero -> their norm is zero (sliced off at the end).
    pnorm_p = jnp.sum(pair_p * pair_p, axis=-1, keepdims=True).T     # (1, P_pad)

    # bf16 MXU operands on v6e/v7x (f32 accumulation / epilogue stay f32).
    img_c = img_p.astype(compute_dtype)
    w_c = w_p.astype(compute_dtype)
    pair_c = pair_p.astype(compute_dtype)

    grid = (B_pad // TB, P_pad // TP)

    in_specs = [
        pl.BlockSpec((TB, F_pad), lambda i, j: (i, 0)),      # raw image tile
        pl.BlockSpec((F_pad, D_pad), lambda i, j: (0, 0)),   # W_img (resident)
        pl.BlockSpec((1, D_pad), lambda i, j: (0, 0)),       # bias   (resident)
        pl.BlockSpec((TP, D_pad), lambda i, j: (0, j)),      # pair tile
    ]
    scratch = [pltpu.VMEM((TB, D_pad), jnp.float32)]         # resident img_feats

    if mode == "distance":
        in_specs.append(pl.BlockSpec((1, TP), lambda i, j: (0, j)))  # ||pair||^2
        scratch.append(pltpu.VMEM((TB, 1), jnp.float32))             # ||feat||^2
        kernel = functools.partial(_distance_score_kernel,
                                   compute_dtype=compute_dtype)
        operands = (img_c, w_c, b_p, pair_c, pnorm_p)
        flops = 2 * B_pad * F_pad * D_pad + 2 * B_pad * P_pad * D_pad + 3 * B_pad * P_pad
    elif mode == "direct":
        kernel = functools.partial(_direct_score_kernel,
                                   compute_dtype=compute_dtype)
        operands = (img_c, w_c, b_p, pair_c)
        flops = 2 * B_pad * F_pad * D_pad + 2 * B_pad * P_pad * D_pad
    else:
        raise ValueError(mode)

    elt = jnp.dtype(compute_dtype).itemsize
    # rough working-set bound: double-buffered tiles + resident scratch
    tile_bytes = (2 * (TB * F_pad + F_pad * D_pad + TP * D_pad) * elt
                  + 2 * (D_pad + TP + TB * TP) * 4
                  + (TB * D_pad + TB) * 4)
    # keep headroom under v7x's 64 MiB physical VMEM
    vmem_limit = int(min(48 * 1024 * 1024, max(16 * 1024 * 1024, 4 * tile_bytes)))
    bytes_accessed = int(elt * (B_pad * F_pad + F_pad * D_pad + P_pad * D_pad)
                         + 4 * (D_pad + P_pad + B_pad * P_pad))

    out = pl.pallas_call(
        kernel,
        out_shape=jax.ShapeDtypeStruct((B_pad, P_pad), jnp.float32),
        grid_spec=pltpu.PrefetchScalarGridSpec(
            num_scalar_prefetch=0,
            grid=grid,
            in_specs=in_specs,
            out_specs=pl.BlockSpec((TB, TP), lambda i, j: (i, j)),
            scratch_shapes=scratch),
        compiler_params=pltpu.CompilerParams(
            dimension_semantics=("parallel", "arbitrary"),
            vmem_limit_bytes=vmem_limit),
        cost_estimate=pl.CostEstimate(flops=int(flops), transcendentals=0,
                                      bytes_accessed=bytes_accessed),
    )(*operands)
    return out[:B, :P]


# ------------------------ compose (all-pairs, decomposed) --------------------

def _compose_parts_kernel(attr_ref, obj_ref, wa_ref, wo_ref, b_ref,
                          ap_ref, op_ref, *, compute_dtype):
    # attr_part = attr_emb @ W_attr ; obj_part = obj_emb @ W_obj + b
    ap_ref[...] = jnp.dot(attr_ref[...].astype(compute_dtype),
                          wa_ref[...].astype(compute_dtype),
                          preferred_element_type=jnp.float32)
    op_ref[...] = (jnp.dot(obj_ref[...].astype(compute_dtype),
                           wo_ref[...].astype(compute_dtype),
                           preferred_element_type=jnp.float32)
                   + b_ref[...])


def compose_all_pairs_embeds(attr_emb, obj_emb, w_attr, w_obj, b,
                             compute_dtype=jnp.float32):
    """pair[a*NO + o] = attr_emb[a] @ W_attr + obj_emb[o] @ W_obj + b."""
    NA, E = attr_emb.shape
    NO = obj_emb.shape[0]
    ap, op = pl.pallas_call(
        functools.partial(_compose_parts_kernel, compute_dtype=compute_dtype),
        out_shape=(jax.ShapeDtypeStruct((NA, E), jnp.float32),
                   jax.ShapeDtypeStruct((NO, E), jnp.float32)),
    )(attr_emb, obj_emb, w_attr, w_obj, b.reshape(1, E))
    # Broadcast-add + reshape kept as cheap plain-JAX glue (attr-major order
    # matches the pair enumeration below).
    return (ap[:, None, :] + op[None, :, :]).reshape(NA * NO, E)


# --------------------------- generic small linear ---------------------------

def _linear_kernel(x_ref, w_ref, b_ref, o_ref):
    o_ref[...] = (jnp.dot(x_ref[...], w_ref[...],
                          preferred_element_type=jnp.float32) + b_ref[...])


def linear(x, w, b):
    """Untiled linear; only used for the aux attr/obj classifiers (train path)."""
    B, Dout = x.shape[0], w.shape[1]
    return pl.pallas_call(
        _linear_kernel,
        out_shape=jax.ShapeDtypeStruct((B, Dout), jnp.float32),
    )(x.astype(jnp.float32), w, b.reshape(1, Dout))


# ------------------------------ Model wrapper --------------------------------

class ManifoldModelPallas:
    """JAX/Pallas port of ManifoldModel's eval forward.

    image_embedder / compose are defined in subclasses of the PyTorch base
    class; deterministic linear stand-ins with the shapes implied by __init__
    are used here.  The compose weight is stored split as (w_attr, w_obj) so
    the all-pairs composition can be decomposed algebraically.
    """

    def __init__(self, num_attrs, num_objs, feat_dim, emb_dim, key,
                 compute_dtype=jnp.float32):
        self.num_attrs = num_attrs
        self.num_objs = num_objs
        self.emb_dim = emb_dim
        self.compute_dtype = compute_dtype

        # dset.pairs == all (attr, obj) combinations, attr-major order
        self.pairs = [(a, o) for a in range(num_attrs) for o in range(num_objs)]
        self.val_attrs = jnp.array([p[0] for p in self.pairs], dtype=jnp.int32)
        self.val_objs = jnp.array([p[1] for p in self.pairs], dtype=jnp.int32)
        self.all_pair2idx = {p: i for i, p in enumerate(self.pairs)}
        self.factor = 2

        ks = jax.random.split(key, 8)
        s = 0.02
        # TODO(synk): image_embedder / compose come from subclasses of
        # ManifoldModel; deterministic linear stand-ins are used here.
        self.attr_emb = s * jax.random.normal(ks[0], (num_attrs, emb_dim), jnp.float32)
        self.obj_emb = s * jax.random.normal(ks[1], (num_objs, emb_dim), jnp.float32)
        w_comp = s * jax.random.normal(ks[2], (2 * emb_dim, emb_dim), jnp.float32)
        self.w_attr = w_comp[:emb_dim]               # (E, E)
        self.w_obj = w_comp[emb_dim:]                # (E, E)
        self.b_comp = jnp.zeros((emb_dim,), jnp.float32)
        self.w_img = s * jax.random.normal(ks[3], (feat_dim, emb_dim), jnp.float32)
        self.b_img = jnp.zeros((emb_dim,), jnp.float32)
        # classifiers from __init__ (lambda_aux / lambda_cls_* > 0 branch)
        self.w_obj_clf = s * jax.random.normal(ks[4], (emb_dim, num_objs), jnp.float32)
        self.b_obj_clf = jnp.zeros((num_objs,), jnp.float32)
        self.w_attr_clf = s * jax.random.normal(ks[5], (emb_dim, num_attrs), jnp.float32)
        self.b_attr_clf = jnp.zeros((num_attrs,), jnp.float32)

    # ---- submodules ----
    def compose_all_pairs(self):
        return compose_all_pairs_embeds(self.attr_emb, self.obj_emb,
                                        self.w_attr, self.w_obj, self.b_comp,
                                        compute_dtype=self.compute_dtype)

    def compose(self, attrs, objs):
        # Generic per-row compose (only the train path needs arbitrary pairs).
        a = jnp.take(self.attr_emb, attrs, axis=0)
        o = jnp.take(self.obj_emb, objs, axis=0)
        return linear(jnp.concatenate([a, o], axis=1),
                      jnp.concatenate([self.w_attr, self.w_obj], axis=0),
                      self.b_comp)

    def obj_clf(self, x):
        return linear(x, self.w_obj_clf, self.b_obj_clf)

    def attr_clf(self, x):
        return linear(x, self.w_attr_clf, self.b_attr_clf)

    # ---- helpers ----
    def _build_scores_dict(self, score):
        # ONE device->host transfer, then host-side column views (avoids P
        # separate device slice ops that would dominate end-to-end latency).
        score_np = np.asarray(jax.device_get(score))
        return {pair: score_np[:, self.all_pair2idx[pair]] for pair in self.pairs}

    # ---- forwards (eval path) ----
    def val_forward_distance_fast(self, x):
        img = x[0]
        pair_embeds = self.compose_all_pairs()                         # (P, E)
        score = fused_scores(img, self.w_img, self.b_img, pair_embeds,
                             mode="distance", compute_dtype=self.compute_dtype)
        return score, self._build_scores_dict(score)

    def val_forward_direct(self, x):
        img = x[0]
        pair_embeds = self.compose_all_pairs()
        score = fused_scores(img, self.w_img, self.b_img, pair_embeds,
                             mode="direct", compute_dtype=self.compute_dtype)
        return score, self._build_scores_dict(score)

    def forward(self, x):
        # eval mode (self.training == False): no loss, return predictions.
        # TODO(synk): train_forward_bce / train_forward_triplet (losses, numpy
        # negative sampling) are not implemented; eval path only.
        score, scores = self.val_forward_distance_fast(x)
        return None, (score, scores)


# --------------------------------- main --------------------------------------

if __name__ == "__main__":
    key = jax.random.PRNGKey(0)
    k_model, k_img = jax.random.split(key)

    B, F, E = 2, 64, 32          # batch, raw image-feature dim, emb_dim
    NA, NO = 4, 4                # num attrs / objs -> 16 pairs

    model = ManifoldModelPallas(NA, NO, F, E, k_model)
    img = jax.random.normal(k_img, (B, F), jnp.float32)

    loss, (score, scores) = model.forward((img,))
    score = jax.block_until_ready(score)

    # pure-JAX reference (original formulation)
    img_feats_ref = img @ model.w_img + model.b_img
    a = jnp.take(model.attr_emb, model.val_attrs, axis=0)
    o = jnp.take(model.obj_emb, model.val_objs, axis=0)
    w_comp = jnp.concatenate([model.w_attr, model.w_obj], axis=0)
    pair_ref = jnp.concatenate([a, o], axis=1) @ w_comp + model.b_comp
    diff = img_feats_ref[:, None, :] - pair_ref[None, :, :]
    score_ref = -jnp.sum(diff * diff, axis=-1)

    assert loss is None
    assert score.shape == (B, NA * NO)
    assert jnp.allclose(score, score_ref, atol=1e-4, rtol=1e-4)
    assert len(scores) == NA * NO and scores[(0, 0)].shape == (B,)

    # val_forward_direct path
    score_d, _ = model.val_forward_direct((img,))
    score_d = jax.block_until_ready(score_d)
    score_d_ref = img_feats_ref @ pair_ref.T
    assert jnp.allclose(score_d, score_d_ref, atol=1e-4, rtol=1e-4)

    # bf16 MXU-operand path (v6e/v7x): same weights, looser tolerance
    model_bf16 = ManifoldModelPallas(NA, NO, F, E, k_model,
                                     compute_dtype=jnp.bfloat16)
    s_bf, _ = model_bf16.val_forward_distance_fast((img,))
    s_bf = jax.block_until_ready(s_bf)
    assert jnp.allclose(s_bf, score_ref, atol=1e-1, rtol=1e-1)

    # smoke-test aux classifiers (train-path only in the original module)
    obj_logits = model.obj_clf(pair_ref)
    attr_logits = model.attr_clf(pair_ref)
    jax.block_until_ready((obj_logits, attr_logits))
    assert obj_logits.shape == (NA * NO, NO)
    assert attr_logits.shape == (NA * NO, NA)

    print("KERNEL_OK")
</pallas_src>

<mosaic_0001>
module attributes {stable_mosaic.version = 11 : i64} {
  func.func @_compose_parts_kernel(%arg0: memref<4x32xf32, #tpu.memory_space<vmem>>, %arg1: memref<4x32xf32, #tpu.memory_space<vmem>>, %arg2: memref<32x32xf32, #tpu.memory_space<vmem>>, %arg3: memref<32x32xf32, #tpu.memory_space<vmem>>, %arg4: memref<1x32xf32, #tpu.memory_space<vmem>>, %arg5: memref<4x32xf32, #tpu.memory_space<vmem>>, %arg6: memref<4x32xf32, #tpu.memory_space<vmem>>) attributes {dimension_semantics = [], scalar_prefetch = 0 : i64, scratch_operands = 0 : i64, tpu.core_type = #tpu.core_type<tc>} {
    %c0 = arith.constant 0 : index
    %c0_0 = arith.constant 0 : index
    %0 = vector.load %arg0[%c0, %c0_0] : memref<4x32xf32, #tpu.memory_space<vmem>>, vector<4x32xf32>
    %c0_1 = arith.constant 0 : index
    %c0_2 = arith.constant 0 : index
    %1 = vector.load %arg2[%c0_1, %c0_2] : memref<32x32xf32, #tpu.memory_space<vmem>>, vector<32x32xf32>
    %cst = arith.constant dense<0.000000e+00> : vector<4x32xf32>
    %2 = tpu.matmul %0, %1, %cst {dimension_numbers = #tpu.dot_dimension_numbers<[1], [0], [0], [1], [0, 0, 1, 1], [], []>} : vector<4x32xf32>, vector<32x32xf32>, vector<4x32xf32> -> vector<4x32xf32>
    %c0_3 = arith.constant 0 : index
    %c0_4 = arith.constant 0 : index
    %3 = vector.load %arg5[%c0_3, %c0_4] : memref<4x32xf32, #tpu.memory_space<vmem>>, vector<4x32xf32>
    tpu.vector_store %arg5[%c0_3, %c0_4], %2 {strides = array<i32>} : memref<4x32xf32, #tpu.memory_space<vmem>>, vector<4x32xf32>,
    %c0_5 = arith.constant 0 : index
    %c0_6 = arith.constant 0 : index
    %4 = vector.load %arg1[%c0_5, %c0_6] : memref<4x32xf32, #tpu.memory_space<vmem>>, vector<4x32xf32>
    %c0_7 = arith.constant 0 : index
    %c0_8 = arith.constant 0 : index
    %5 = vector.load %arg3[%c0_7, %c0_8] : memref<32x32xf32, #tpu.memory_space<vmem>>, vector<32x32xf32>
    %cst_9 = arith.constant dense<0.000000e+00> : vector<4x32xf32>
    %6 = tpu.matmul %4, %5, %cst_9 {dimension_numbers = #tpu.dot_dimension_numbers<[1], [0], [0], [1], [0, 0, 1, 1], [], []>} : vector<4x32xf32>, vector<32x32xf32>, vector<4x32xf32> -> vector<4x32xf32>
    %c0_10 = arith.constant 0 : index
    %c0_11 = arith.constant 0 : index
    %7 = vector.load %arg4[%c0_10, %c0_11] : memref<1x32xf32, #tpu.memory_space<vmem>>, vector<1x32xf32>
    %8 = vector.broadcast %7 : vector<1x32xf32> to vector<4x32xf32>
    %9 = arith.addf %6, %8 : vector<4x32xf32>
    %c0_12 = arith.constant 0 : index
    %c0_13 = arith.constant 0 : index
    %10 = vector.load %arg6[%c0_12, %c0_13] : memref<4x32xf32, #tpu.memory_space<vmem>>, vector<4x32xf32>
    tpu.vector_store %arg6[%c0_12, %c0_13], %9 {strides = array<i32>} : memref<4x32xf32, #tpu.memory_space<vmem>>, vector<4x32xf32>,
    return
  }
}

</mosaic_0001>

<llo_original>
// kernel: tpu_custom_call.1
$region0: #{tpu_custom_call.1}
  #allocation0 [shape = 'u32[]', space=smem, size = 0x4, offset = 0x4, fixed_abs, tag = 'smem constant byte address 0x4 - core index']
  #allocation1 [shape = 'u32[144,128]{1,0:T(1,128)}', space=vmem, size = 0x12000, scoped, tag = 'internal scratch']
  %s0 = inlined_call_operand.hbm [shape: f32[4,32], index: 0, kind: input, shape index: {}]
  %s1 = inlined_call_operand.hbm [shape: f32[4,32], index: 1, kind: input, shape index: {}]
  %s2 = inlined_call_operand.hbm [shape: f32[32,32], index: 2, kind: input, shape index: {}]
  %s3 = inlined_call_operand.hbm [shape: f32[32,32], index: 3, kind: input, shape index: {}]
  %s4 = inlined_call_operand.vmem [shape: f32[1,32], index: 4, kind: input, shape index: {}]
  %s5 = inlined_call_operand.hbm [shape: f32[4,32], index: 5, kind: output, shape index: {0}]
  %s6 = inlined_call_operand.hbm [shape: f32[4,32], index: 6, kind: output, shape index: {1}]
  %7 = xla_tuple %s5, %s6
  %s8 = sld [smem:[#allocation0]]
  $region54: #{tpu_custom_call.1} parent=0
    _
  %s10 = ssub.s32 1, %s8
  %s11 = scalar_select 0, %s10, %s8
  $region1: #{tpu_custom_call.1} parent=0
    #allocation2 [shape = 'u8[2048]{0}', space=vmem, size = 0x800, scoped, tag = 'input window, operand 0, single buffered']
    #allocation3 [shape = 's32[1]{0}', space=sflag, size = 0x4, scoped, tag = 'scoped memory for tpu_custom_call.1']
    #allocation4 [shape = 's32[1]{0}', space=sflag, size = 0x4, scoped, tag = 'scoped memory for tpu_custom_call.1']
    #allocation5 [shape = 'u8[2048]{0}', space=vmem, size = 0x800, scoped, tag = 'input window, operand 1, single buffered']
    #allocation6 [shape = 's32[1]{0}', space=sflag, size = 0x4, scoped, tag = 'scoped memory for tpu_custom_call.1']
    #allocation7 [shape = 'u8[16384]{0}', space=vmem, size = 0x4000, scoped, tag = 'input window, operand 2, single buffered']
    #allocation8 [shape = 'u8[16384]{0}', space=vmem, size = 0x4000, scoped, tag = 'input window, operand 3, single buffered']
    #allocation9 [shape = 's32[1]{0}', space=sflag, size = 0x4, scoped, tag = 'scoped memory for tpu_custom_call.1']
    #allocation10 [shape = 'u8[2048]{0}', space=vmem, size = 0x800, scoped, tag = 'output window, operand 0, single buffered']
    #allocation11 [shape = 'u8[2048]{0}', space=vmem, size = 0x800, scoped, tag = 'output window, operand 1, single buffered']
    #allocation12 [shape = 's32[1]{0}', space=sflag, size = 0x4, scoped, tag = 'scoped memory for tpu_custom_call.1']
    %12 = vsyncpa [#allocation3], 0
    %13 = vsyncpa [#allocation6], 0
    %14 = vsyncpa [#allocation9], 0
    %15 = vsyncpa [#allocation4], 0
    %16 = vsyncpa [#allocation12], 0
    // Predicated region
    $region2: #{tpu_custom_call.1} parent=1 // pred_check
      _
    $region3: #{tpu_custom_call.1} parent=1 // pred_check_branch
      %18 = sbr.rel (0) target = $region5
    $region4: #{tpu_custom_call.1} parent=1 // pred_region
      %s20 = ssub.s32 64, 64
      %21 = vsyncadd [#allocation3], %s20
      %s23 = sshll.u32 [#allocation2], 4
      %s24 = int_to_ptr.vmem [resolvable:$true] %s23
      %26 = dma.hbm_to_vmem [thread:$0]  %s0, 64, %s24, [#allocation3]
    $region5: #{tpu_custom_call.1} parent=1 // pred_fallthru
      _
    // Predicated region
    $region6: #{tpu_custom_call.1} parent=1 // pred_check
      _
    $region7: #{tpu_custom_call.1} parent=1 // pred_check_branch
      %28 = sbr.rel (0) target = $region9
    $region8: #{tpu_custom_call.1} parent=1 // pred_region
      %s30 = ssub.s32 64, 64
      %31 = vsyncadd [#allocation6], %s30
      %s33 = sshll.u32 [#allocation5], 4
      %s34 = int_to_ptr.vmem [resolvable:$true] %s33
      %36 = dma.hbm_to_vmem [thread:$0]  %s1, 64, %s34, [#allocation6]
    $region9: #{tpu_custom_call.1} parent=1 // pred_fallthru
      _
    // Predicated region
    $region10: #{tpu_custom_call.1} parent=1 // pred_check
      _
    $region11: #{tpu_custom_call.1} parent=1 // pred_check_branch
      %38 = sbr.rel (0) target = $region13
    $region12: #{tpu_custom_call.1} parent=1 // pred_region
      %s40 = ssub.s32 512, 512
      %41 = vsyncadd [#allocation6], %s40
      %s42 = sshll.u32 [#allocation7], 4
      %s43 = int_to_ptr.vmem [resolvable:$true] %s42
      %48 = dma.hbm_to_vmem [thread:$0]  %s2, 512, %s43, [#allocation6], 128, 128, 8
    $region13: #{tpu_custom_call.1} parent=1 // pred_fallthru
      _
    // Predicated region
    $region14: #{tpu_custom_call.1} parent=1 // pred_check
      _
    $region15: #{tpu_custom_call.1} parent=1 // pred_check_branch
      %50 = sbr.rel (0) target = $region17
    $region16: #{tpu_custom_call.1} parent=1 // pred_region
      %s52 = ssub.s32 512, 512
      %53 = vsyncadd [#allocation9], %s52
      %s54 = sshll.u32 [#allocation8], 4
      %s55 = int_to_ptr.vmem [resolvable:$true] %s54
      %60 = dma.hbm_to_vmem [thread:$0]  %s3, 512, %s55, [#allocation9], 128, 128, 8
    $region17: #{tpu_custom_call.1} parent=1 // pred_fallthru
      _
    // Predicated region
    $region18: #{tpu_custom_call.1} parent=1 // pred_check
      _
    $region19: #{tpu_custom_call.1} parent=1 // pred_check_branch
      %62 = sbr.rel (0) target = $region21
    $region20: #{tpu_custom_call.1} parent=1 // pred_region
      _
    $region21: #{tpu_custom_call.1} parent=1 // pred_fallthru
      _
    // Predicated region
    $region22: #{tpu_custom_call.1} parent=1 // pred_check
      _
    $region23: #{tpu_custom_call.1} parent=1 // pred_check_branch
      %64 = sbr.rel (0) target = $region25
    $region24: #{tpu_custom_call.1} parent=1 // pred_region
      %65 = dma.done [#allocation3], 64
    $region25: #{tpu_custom_call.1} parent=1 // pred_fallthru
      _
    // Predicated region
    $region26: #{tpu_custom_call.1} parent=1 // pred_check
      _
    $region27: #{tpu_custom_call.1} parent=1 // pred_check_branch
      %67 = sbr.rel (0) target = $region29
    $region28: #{tpu_custom_call.1} parent=1 // pred_region
      %68 = dma.done [#allocation6], 64
    $region29: #{tpu_custom_call.1} parent=1 // pred_fallthru
      _
    // Predicated region
    $region30: #{tpu_custom_call.1} parent=1 // pred_check
      _
    $region31: #{tpu_custom_call.1} parent=1 // pred_check_branch
      %70 = sbr.rel (0) target = $region33
    $region32: #{tpu_custom_call.1} parent=1 // pred_region
      %71 = dma.done [#allocation6], 512
    $region33: #{tpu_custom_call.1} parent=1 // pred_fallthru
      _
    // Predicated region
    $region34: #{tpu_custom_call.1} parent=1 // pred_check
      _
    $region35: #{tpu_custom_call.1} parent=1 // pred_check_branch
      %73 = sbr.rel (0) target = $region37
    $region36: #{tpu_custom_call.1} parent=1 // pred_region
      %74 = dma.done [#allocation9], 512
    $region37: #{tpu_custom_call.1} parent=1 // pred_fallthru
      _
    %v75 = vld [vmem:[#allocation2] sm:$0xf]
    %v76 = vld [vmem:[#allocation7] sm:$0xff]
    %v77 = vld [vmem:[#allocation7 + $0x8] sm:$0xff]
    %v78 = vld [vmem:[#allocation7 + $0x10] sm:$0xff]
    %v79 = vld [vmem:[#allocation7 + $0x18] sm:$0xff]
    %vm80 = vcmask 261120
    %v82 = vsel %vm80, %v75, 0
    %84 = vmatprep.subr.mxu0 0.0
    %85 = vmatpush1.msra.mxu0 %v76
    %86 = vmatprep.subr.mxu0 0.0
    %87 = vmatpush1.msra.mxu0 %v77
    %88 = vmatprep.subr.mxu0 0.0
    %89 = vmatpush1.msra.mxu0 %v78
    %90 = vmatprep.subr.mxu0 0.0
    %91 = vmatpush1.msra.mxu0 %v79
    %92 = vmatprep.subr.mxu0 0.0
    %93 = vmatpush1.msra.mxu0 0.0
    %94 = vmatprep.subr.mxu0 0.0
    %95 = vmatpush1.msra.mxu0 0.0
    %96 = vmatprep.subr.mxu0 0.0
    %97 = vmatpush1.msra.mxu0 0.0
    %98 = vmatprep.subr.mxu0 0.0
    %99 = vmatpush1.msra.mxu0 0.0
    %100 = vmatprep.subr.mxu0 0.0
    %101 = vmatpush1.msra.mxu0 0.0
    %102 = vmatprep.subr.mxu0 0.0
    %103 = vmatpush1.msra.mxu0 0.0
    %104 = vmatprep.subr.mxu0 0.0
    %105 = vmatpush1.msra.mxu0 0.0
    %106 = vmatprep.subr.mxu0 0.0
    %107 = vmatpush1.msra.mxu0 0.0
    %108 = vmatprep.subr.mxu0 0.0
    %109 = vmatpush1.msra.mxu0 0.0
    %110 = vmatprep.subr.mxu0 0.0
    %111 = vmatpush1.msra.mxu0 0.0
    %112 = vmatprep.subr.mxu0 0.0
    %113 = vmatpush1.msra.mxu0 0.0
    %114 = vmatprep.subr.mxu0 0.0
    %115 = vmatpush1.msra.mxu0 0.0
    %116 = vmatprep.subr.mxu0 0.0
    %117 = vmatpush1.msra.mxu0 0.0
    %118 = vmatprep.subr.mxu0 0.0
    %119 = vmatpush1.msra.mxu0 0.0
    %120 = vmatprep.subr.mxu0 0.0
    %121 = vmatpush1.msra.mxu0 0.0
    %122 = vmatprep.subr.mxu0 0.0
    %123 = vmatpush1.msra.mxu0 0.0
    %124 = vmatprep.subr.mxu0 0.0
    %125 = vmatpush1.msra.mxu0 0.0
    %126 = vmatprep.subr.mxu0 0.0
    %127 = vmatpush1.msra.mxu0 0.0
    %128 = vmatprep.subr.mxu0 0.0
    %129 = vmatpush1.msra.mxu0 0.0
    %130 = vmatprep.subr.mxu0 0.0
    %131 = vmatpush1.msra.mxu0 0.0
    %132 = vmatprep.subr.mxu0 0.0
    %133 = vmatpush1.msra.mxu0 0.0
    %134 = vmatprep.subr.mxu0 0.0
    %135 = vmatpush1.msra.mxu0 0.0
    %136 = vmatprep.subr.mxu0 0.0
    %137 = vmatpush1.msra.mxu0 0.0
    %138 = vmatprep.subr.mxu0 0.0
    %139 = vmatpush1.msra.mxu0 0.0
    %140 = vmatprep.subr.mxu0 0.0
    %141 = vmatpush1.msra.mxu0 0.0
    %142 = vmatprep.subr.mxu0 0.0
    %143 = vmatpush1.msra.mxu0 0.0
    %144 = vmatprep.subr.mxu0 0.0
    %145 = vmatpush1.msra.mxu0 0.0
    %146 = vmatprep.subr.mxu0 0.0
    %147 = vmatpush1.msra.mxu0 0.0
    %148 = vmatprep.mubr.f32.mxu0 0.0
    %149 = vmatmul.mubr.f32.gmra.mrb[0].mxu0 %v82
    %v150 = vpop.f32.mrb[0].mxu0
    %v151 = vadd.f32 0.0, %v150
    %v152 = vpop.f32.mrb[0].mxu0
    %153 = vdwg.mxu0
    %vm154 = vcmask 257024
    %155 = vst.msk [vmem:[#allocation10] sm:$0xf] %vm154, %v151
    %v156 = vld [vmem:[#allocation5] sm:$0xf]
    %v157 = vld [vmem:[#allocation8] sm:$0xff]
    %v158 = vld [vmem:[#allocation8 + $0x8] sm:$0xff]
    %v159 = vld [vmem:[#allocation8 + $0x10] sm:$0xff]
    %v160 = vld [vmem:[#allocation8 + $0x18] sm:$0xff]
    %v161 = vld [vmem:[%s4] sm:$0x1]
    %v163 = vlaneseq
    %v164 = vshrl.u32 %v163, 7
    %v165 = vsub.s32 0, %v164
    %v166 = vrot.slane %v161, %v165
    %v169 = vsel %vm80, %v156, 0
    %171 = vmatprep.subr.mxu0 0.0
    %172 = vmatpush1.msra.mxu0 %v157
    %173 = vmatprep.subr.mxu0 0.0
    %174 = vmatpush1.msra.mxu0 %v158
    %175 = vmatprep.subr.mxu0 0.0
    %176 = vmatpush1.msra.mxu0 %v159
    %177 = vmatprep.subr.mxu0 0.0
    %178 = vmatpush1.msra.mxu0 %v160
    %179 = vmatprep.subr.mxu0 0.0
    %180 = vmatpush1.msra.mxu0 0.0
    %181 = vmatprep.subr.mxu0 0.0
    %182 = vmatpush1.msra.mxu0 0.0
    %183 = vmatprep.subr.mxu0 0.0
    %184 = vmatpush1.msra.mxu0 0.0
    %185 = vmatprep.subr.mxu0 0.0
    %186 = vmatpush1.msra.mxu0 0.0
    %187 = vmatprep.subr.mxu0 0.0
    %188 = vmatpush1.msra.mxu0 0.0
    %189 = vmatprep.subr.mxu0 0.0
    %190 = vmatpush1.msra.mxu0 0.0
    %191 = vmatprep.subr.mxu0 0.0
    %192 = vmatpush1.msra.mxu0 0.0
    %193 = vmatprep.subr.mxu0 0.0
    %194 = vmatpush1.msra.mxu0 0.0
    %195 = vmatprep.subr.mxu0 0.0
    %196 = vmatpush1.msra.mxu0 0.0
    %197 = vmatprep.subr.mxu0 0.0
    %198 = vmatpush1.msra.mxu0 0.0
    %199 = vmatprep.subr.mxu0 0.0
    %200 = vmatpush1.msra.mxu0 0.0
    %201 = vmatprep.subr.mxu0 0.0
    %202 = vmatpush1.msra.mxu0 0.0
    %203 = vmatprep.subr.mxu0 0.0
    %204 = vmatpush1.msra.mxu0 0.0
    %205 = vmatprep.subr.mxu0 0.0
    %206 = vmatpush1.msra.mxu0 0.0
    %207 = vmatprep.subr.mxu0 0.0
    %208 = vmatpush1.msra.mxu0 0.0
    %209 = vmatprep.subr.mxu0 0.0
    %210 = vmatpush1.msra.mxu0 0.0
    %211 = vmatprep.subr.mxu0 0.0
    %212 = vmatpush1.msra.mxu0 0.0
    %213 = vmatprep.subr.mxu0 0.0
    %214 = vmatpush1.msra.mxu0 0.0
    %215 = vmatprep.subr.mxu0 0.0
    %216 = vmatpush1.msra.mxu0 0.0
    %217 = vmatprep.subr.mxu0 0.0
    %218 = vmatpush1.msra.mxu0 0.0
    %219 = vmatprep.subr.mxu0 0.0
    %220 = vmatpush1.msra.mxu0 0.0
    %221 = vmatprep.subr.mxu0 0.0
    %222 = vmatpush1.msra.mxu0 0.0
    %223 = vmatprep.subr.mxu0 0.0
    %224 = vmatpush1.msra.mxu0 0.0
    %225 = vmatprep.subr.mxu0 0.0
    %226 = vmatpush1.msra.mxu0 0.0
    %227 = vmatprep.subr.mxu0 0.0
    %228 = vmatpush1.msra.mxu0 0.0
    %229 = vmatprep.subr.mxu0 0.0
    %230 = vmatpush1.msra.mxu0 0.0
    %231 = vmatprep.subr.mxu0 0.0
    %232 = vmatpush1.msra.mxu0 0.0
    %233 = vmatprep.subr.mxu0 0.0
    %234 = vmatpush1.msra.mxu0 0.0
    %235 = vmatprep.mubr.f32.mxu0 0.0
    %236 = vmatmul.mubr.f32.gmra.mrb[0].mxu0 %v169
    %v237 = vpop.f32.mrb[0].mxu0
    %v238 = vadd.f32 %v166, %v237
    %v239 = vpop.f32.mrb[0].mxu0
    %240 = vdwg.mxu0
    %241 = vst.msk [vmem:[#allocation11] sm:$0xf] %vm154, %v238
    // Predicated region
    $region38: #{tpu_custom_call.1} parent=1 // pred_check
      _
    $region39: #{tpu_custom_call.1} parent=1 // pred_check_branch
      %243 = sbr.rel (0) target = $region41
    $region40: #{tpu_custom_call.1} parent=1 // pred_region
      %s245 = ssub.s32 64, 64
      %246 = vsyncadd [#allocation4], %s245
      %s248 = sshll.u32 [#allocation10], 4
      %s249 = int_to_ptr.vmem [resolvable:$true] %s248
      %251 = dma.vmem_to_hbm [thread:$0]  %s249, 64, %s5, [#allocation4]
    $region41: #{tpu_custom_call.1} parent=1 // pred_fallthru
      _
    // Predicated region
    $region42: #{tpu_custom_call.1} parent=1 // pred_check
      _
    $region43: #{tpu_custom_call.1} parent=1 // pred_check_branch
      %253 = sbr.rel (0) target = $region45
    $region44: #{tpu_custom_call.1} parent=1 // pred_region
      %s255 = ssub.s32 64, 64
      %256 = vsyncadd [#allocation12], %s255
      %s258 = sshll.u32 [#allocation11], 4
      %s259 = int_to_ptr.vmem [resolvable:$true] %s258
      %261 = dma.vmem_to_hbm [thread:$0]  %s259, 64, %s6, [#allocation12]
    $region45: #{tpu_custom_call.1} parent=1 // pred_fallthru
      _
    // Predicated region
    $region46: #{tpu_custom_call.1} parent=1 // pred_check
      _
    $region47: #{tpu_custom_call.1} parent=1 // pred_check_branch
      %263 = sbr.rel (0) target = $region49
    $region48: #{tpu_custom_call.1} parent=1 // pred_region
      %264 = dma.done [#allocation4], 64
    $region49: #{tpu_custom_call.1} parent=1 // pred_fallthru
      _
    // Predicated region
    $region50: #{tpu_custom_call.1} parent=1 // pred_check
      _
    $region51: #{tpu_custom_call.1} parent=1 // pred_check_branch
      %266 = sbr.rel (0) target = $region53
    $region52: #{tpu_custom_call.1} parent=1 // pred_region
      %267 = dma.done [#allocation12], 64
    $region53: #{tpu_custom_call.1} parent=1 // pred_fallthru
      _
    %268 = vsyncpa [#allocation3], 1
    %269 = vsyncpa [#allocation6], 1
    %270 = vsyncpa [#allocation9], 1
    %271 = vsyncpa [#allocation4], 1
    %272 = vsyncpa [#allocation12], 1

</llo_original>
